<compile_context>
chip_gen: v6e
topology: v6e:2x2x1
jax: 0.10.0
libtpu: 0.0.40
codegen_flags: <defaults>
</compile_context>

<pallas_src>
import jax
import jax.numpy as jnp
from jax.experimental import pallas as pl
from jax.experimental.pallas import tpu as pltpu


def decoder2_kernel(mo_ref, hid_ref, mem_ref, wcomb_ref, wh_ref, bias_ref, out_ref):
    B, S, twoH = mo_ref.shape
    H = twoH // 2
    fourH = 4 * H
    out_w = out_ref.shape[1]

    mo = mo_ref[...]                                   # (B, S, 2H)
    h = hid_ref[0]                                     # (B, H)   hidden state
    c = mem_ref[0]                                     # (B, H)   cell state

    bias = bias_ref[...]                               # (4, 4H) packed slab
    blstm = bias[0:1, :]                               # (1, 4H)  b_ih + b_hh
    bg2 = bias[1:2, :H]                                # (1, H)   linear_g2.bias
    wg3 = bias[2:3, :H]                                # (1, H)   linear_g3.weight
    bg3 = bias[3:4, 0:1]                               # (1, 1)   linear_g3.bias

    wcomb = wcomb_ref[...]                             # (2H, 5H) = [wih | wg1]
    wih = wcomb[:, :fourH]                             # (2H, 4H) lane-tile-aligned slice
    wg1 = wcomb[:, fourH:]                             # (2H, H)  starts at lane 128 (aligned)

    # ---- fused h-driven matmul: h @ [whh | wg2] -> one MXU push -------------------------
    hW = jnp.dot(h, wh_ref[...], preferred_element_type=jnp.float32)   # (B, 5H)
    h_whh = hW[:, :fourH]                              # (B, 4H)  lane-aligned slice
    g2 = hW[:, fourH:] + bg2                           # (B, H)   linear_g2(hidden)

    # ---- attention_2.score --------------------------------------------------------------
    g1 = jnp.dot(mo.reshape(B * S, twoH), wg1,
                 preferred_element_type=jnp.float32).reshape(B, S, H)   # linear_g1 (no bias)
    t = jnp.tanh(g1 + g2[:, None, :])                                   # (B, S, H)
    # linear_g3 as a VPU multiply + XLU cross-lane reduce (not an MXU dot)
    scores = jnp.sum(t * wg3[:, None, :], axis=-1) + bg3                # (B, S)

    # softmax over the sequence axis (torch: F.softmax(..., dim=1))
    m = jnp.max(scores, axis=-1, keepdims=True)
    e = jnp.exp(scores - m)
    w = e / jnp.sum(e, axis=-1, keepdims=True)                          # (B, S)

    # attn_combination = bmm(w (B,1,S), match_output (B,S,2H)) -> (B, 2H)
    comb = jnp.sum(w[:, :, None] * mo, axis=1)                          # (B, 2H)

    # ---- single LSTM step, PyTorch gate order i, f, g, o --------------------------------
    gates = (jnp.dot(comb, wih, preferred_element_type=jnp.float32)
             + h_whh + blstm)                                           # (B, 4H)

    # One fused activation pass over the whole gates vreg:
    #   lanes [2H, 3H) (the g gate) get tanh via 2*sigmoid(2x) - 1, everything else sigmoid.
    lane = jax.lax.broadcasted_iota(jnp.int32, gates.shape, 1)
    is_g = (lane >= 2 * H) & (lane < 3 * H)
    sg = jax.nn.sigmoid(jnp.where(is_g, 2.0 * gates, gates))
    act = jnp.where(is_g, 2.0 * sg - 1.0, sg)                           # (B, 4H)

    i = act[:, 0 * H:1 * H]
    f = act[:, 1 * H:2 * H]
    g = act[:, 2 * H:3 * H]
    o = act[:, 3 * H:4 * H]
    c_new = f * c + i * g
    h_new = o * jnp.tanh(c_new)

    # ---- single lane-dense store: [h_new | c_new | attn_weights | zero-pad] -------------
    pieces = [h_new, c_new, w]
    if out_w > twoH + S:
        pieces.append(jnp.zeros((B, out_w - (twoH + S)), jnp.float32))
    out_ref[...] = jnp.concatenate(pieces, axis=-1)


def decoder2_pallas(match_output, hidden, mem, packed):
    B, S, twoH = match_output.shape
    H = twoH // 2
    # Pad the merged output row up to a 128-lane multiple so the writeback is one unmasked vst.
    out_w = max(128, ((twoH + S + 127) // 128) * 128)

    vmem = lambda: pl.BlockSpec(memory_space=pltpu.MemorySpace.VMEM)
    out = pl.pallas_call(
        decoder2_kernel,
        out_shape=jax.ShapeDtypeStruct((B, out_w), jnp.float32),
        in_specs=[vmem() for _ in range(6)],
        out_specs=vmem(),
    )(match_output, hidden, mem, packed["wcomb"], packed["wh"], packed["bias"])

    h_new = out[:, :H]
    c_new = out[:, H:twoH]
    w = out[:, twoH:twoH + S]                           # pad lanes beyond 2H+S are ignored
    output = h_new[:, None, :]                          # (B, 1, H)  -- LSTM output
    mem_out = c_new[None, :, :]                         # (1, B, H)  -- new cell state
    attn_weight = w[:, None, :]                         # (B, 1, S)  -- attn_weights.transpose(1,2)
    return output, mem_out, attn_weight


def init_params(key, H):
    ks = jax.random.split(key, 9)

    def unif(k, shape, fan_in):
        bound = 1.0 / jnp.sqrt(jnp.float32(fan_in))
        return jax.random.uniform(k, shape, jnp.float32, -bound, bound)

    # PyTorch Linear / LSTM weights are (out, in); stored here already transposed
    # to (in, out) so the kernel can do x @ W directly.
    return dict(
        wg2=unif(ks[0], (H, H), H),                 # linear_g2.weight^T
        bg2=unif(ks[1], (1, H), H),                 # linear_g2.bias
        wg1=unif(ks[2], (2 * H, H), 2 * H),         # linear_g1.weight^T (no bias)
        wg3=unif(ks[3], (1, H), H),                 # linear_g3.weight   (out_features = 1)
        bg3=unif(ks[4], (1, 1), H),                 # linear_g3.bias
        wih=unif(ks[5], (2 * H, 4 * H), H),         # lstm weight_ih_l0^T, gates [i, f, g, o]
        whh=unif(ks[6], (H, 4 * H), H),             # lstm weight_hh_l0^T
        blstm=unif(ks[7], (1, 4 * H), H) + unif(ks[8], (1, 4 * H), H),   # b_ih + b_hh
    )


def pack_params(p, H):
    # Done ONCE (outside any decode loop): fuse weights that share a contraction dim and pack
    # the tiny bias-like parameters into a single (4, 4H) slab -> fewer DMA descriptors per call.
    four_h = 4 * H
    bias = jnp.zeros((4, four_h), jnp.float32)
    bias = bias.at[0, :].set(p["blstm"][0])           # row 0: lstm bias (b_ih + b_hh)
    bias = bias.at[1, :H].set(p["bg2"][0])            # row 1: linear_g2.bias
    bias = bias.at[2, :H].set(p["wg3"][0])            # row 2: linear_g3.weight
    bias = bias.at[3, 0].set(p["bg3"][0, 0])          # row 3: linear_g3.bias
    return dict(
        wcomb=jnp.concatenate([p["wih"], p["wg1"]], axis=1),      # (2H, 5H) = [wih | wg1]
        wh=jnp.concatenate([p["whh"], p["wg2"]], axis=1),         # (H, 5H)  = [whh | wg2]
        bias=bias,                                                # (4, 4H)
    )


def decoder2_ref(match_output, hidden, mem, p):
    # pure-JAX reference with identical semantics (for correctness check)
    h, c = hidden[0], mem[0]
    H = h.shape[1]
    g2 = h @ p["wg2"] + p["bg2"]
    g1 = jnp.einsum('bsk,kh->bsh', match_output, p["wg1"])
    t = jnp.tanh(g1 + g2[:, None, :])
    scores = jnp.einsum('bsh,h->bs', t, p["wg3"][0]) + p["bg3"][0, 0]
    w = jax.nn.softmax(scores, axis=-1)
    comb = jnp.einsum('bs,bsk->bk', w, match_output)
    gates = comb @ p["wih"] + h @ p["whh"] + p["blstm"]
    i = jax.nn.sigmoid(gates[:, :H]); f = jax.nn.sigmoid(gates[:, H:2 * H])
    g = jnp.tanh(gates[:, 2 * H:3 * H]); o = jax.nn.sigmoid(gates[:, 3 * H:])
    c_new = f * c + i * g
    h_new = o * jnp.tanh(c_new)
    return h_new[:, None, :], c_new[None], w[:, None, :]


if __name__ == "__main__":
    B, S, H = 2, 8, 32
    key = jax.random.PRNGKey(0)
    kp, k1, k2, k3 = jax.random.split(key, 4)
    params = init_params(kp, H)
    packed = pack_params(params, H)

    match_output = jax.random.normal(k1, (B, S, 2 * H), jnp.float32)
    hidden = jax.random.normal(k2, (1, B, H), jnp.float32)
    mem = jax.random.normal(k3, (1, B, H), jnp.float32)

    decoder2_jit = jax.jit(decoder2_pallas)
    out, mem_out, attn_w = decoder2_jit(match_output, hidden, mem, packed)
    jax.block_until_ready((out, mem_out, attn_w))

    ro, rm, ra = decoder2_ref(match_output, hidden, mem, params)
    assert out.shape == (B, 1, H) and mem_out.shape == (1, B, H) and attn_w.shape == (B, 1, S)
    assert jnp.allclose(out, ro, atol=1e-4), "lstm output mismatch"
    assert jnp.allclose(mem_out, rm, atol=1e-4), "cell state mismatch"
    assert jnp.allclose(attn_w, ra, atol=1e-4), "attention weights mismatch"
    print("KERNEL_OK")
</pallas_src>

<mosaic_0001>
module attributes {stable_mosaic.version = 11 : i64} {
  func.func @decoder2_kernel(%arg0: memref<2x8x64xf32, #tpu.memory_space<vmem>>, %arg1: memref<1x2x32xf32, #tpu.memory_space<vmem>>, %arg2: memref<1x2x32xf32, #tpu.memory_space<vmem>>, %arg3: memref<64x160xf32, #tpu.memory_space<vmem>>, %arg4: memref<32x160xf32, #tpu.memory_space<vmem>>, %arg5: memref<4x128xf32, #tpu.memory_space<vmem>>, %arg6: memref<2x128xf32, #tpu.memory_space<vmem>>) attributes {dimension_semantics = [], scalar_prefetch = 0 : i64, scratch_operands = 0 : i64, tpu.core_type = #tpu.core_type<tc>} {
    %c0 = arith.constant 0 : index
    %c0_0 = arith.constant 0 : index
    %c0_1 = arith.constant 0 : index
    %0 = vector.load %arg0[%c0, %c0_0, %c0_1] : memref<2x8x64xf32, #tpu.memory_space<vmem>>, vector<2x8x64xf32>
    %c0_2 = arith.constant 0 : index
    %c0_3 = arith.constant 0 : index
    %c0_4 = arith.constant 0 : index
    %1 = vector.load %arg1[%c0_2, %c0_3, %c0_4] : memref<1x2x32xf32, #tpu.memory_space<vmem>>, vector<1x2x32xf32>
    %2 = vector.shape_cast %1 : vector<1x2x32xf32> to vector<2x32xf32>
    %c0_5 = arith.constant 0 : index
    %c0_6 = arith.constant 0 : index
    %c0_7 = arith.constant 0 : index
    %3 = vector.load %arg2[%c0_5, %c0_6, %c0_7] : memref<1x2x32xf32, #tpu.memory_space<vmem>>, vector<1x2x32xf32>
    %4 = vector.shape_cast %3 : vector<1x2x32xf32> to vector<2x32xf32>
    %c0_8 = arith.constant 0 : index
    %c0_9 = arith.constant 0 : index
    %5 = vector.load %arg5[%c0_8, %c0_9] : memref<4x128xf32, #tpu.memory_space<vmem>>, vector<4x128xf32>
    %6 = vector.extract_strided_slice %5 {offsets = [0, 0], sizes = [1, 128], strides = [1, 1]} : vector<4x128xf32> to vector<1x128xf32>
    %7 = vector.extract_strided_slice %5 {offsets = [1, 0], sizes = [1, 32], strides = [1, 1]} : vector<4x128xf32> to vector<1x32xf32>
    %8 = vector.extract_strided_slice %5 {offsets = [2, 0], sizes = [1, 32], strides = [1, 1]} : vector<4x128xf32> to vector<1x32xf32>
    %9 = vector.extract_strided_slice %5 {offsets = [3, 0], sizes = [1, 1], strides = [1, 1]} : vector<4x128xf32> to vector<1x1xf32>
    %c0_10 = arith.constant 0 : index
    %c0_11 = arith.constant 0 : index
    %10 = vector.load %arg3[%c0_10, %c0_11] : memref<64x160xf32, #tpu.memory_space<vmem>>, vector<64x160xf32>
    %11 = vector.extract_strided_slice %10 {offsets = [0, 0], sizes = [64, 128], strides = [1, 1]} : vector<64x160xf32> to vector<64x128xf32>
    %12 = vector.extract_strided_slice %10 {offsets = [0, 128], sizes = [64, 32], strides = [1, 1]} : vector<64x160xf32> to vector<64x32xf32>
    %c0_12 = arith.constant 0 : index
    %c0_13 = arith.constant 0 : index
    %13 = vector.load %arg4[%c0_12, %c0_13] : memref<32x160xf32, #tpu.memory_space<vmem>>, vector<32x160xf32>
    %cst = arith.constant dense<0.000000e+00> : vector<2x160xf32>
    %14 = tpu.matmul %2, %13, %cst {dimension_numbers = #tpu.dot_dimension_numbers<[1], [0], [0], [1], [0, 0, 1, 1], [], []>} : vector<2x32xf32>, vector<32x160xf32>, vector<2x160xf32> -> vector<2x160xf32>
    %15 = vector.extract_strided_slice %14 {offsets = [0, 0], sizes = [2, 128], strides = [1, 1]} : vector<2x160xf32> to vector<2x128xf32>
    %16 = vector.extract_strided_slice %14 {offsets = [0, 128], sizes = [2, 32], strides = [1, 1]} : vector<2x160xf32> to vector<2x32xf32>
    %17 = vector.broadcast %7 : vector<1x32xf32> to vector<2x32xf32>
    %18 = arith.addf %16, %17 : vector<2x32xf32>
    %19 = vector.shape_cast %0 : vector<2x8x64xf32> to vector<16x64xf32>
    %cst_14 = arith.constant dense<0.000000e+00> : vector<16x32xf32>
    %20 = tpu.matmul %19, %12, %cst_14 {dimension_numbers = #tpu.dot_dimension_numbers<[1], [0], [0], [1], [0, 0, 1, 1], [], []>} : vector<16x64xf32>, vector<64x32xf32>, vector<16x32xf32> -> vector<16x32xf32>
    %21 = vector.shape_cast %20 : vector<16x32xf32> to vector<2x8x32xf32>
    %22 = vector.shape_cast %18 : vector<2x32xf32> to vector<2x1x32xf32>
    %23 = vector.broadcast %22 : vector<2x1x32xf32> to vector<2x8x32xf32>
    %24 = arith.addf %21, %23 : vector<2x8x32xf32>
    %25 = math.tanh %24 : vector<2x8x32xf32>
    %26 = vector.shape_cast %8 : vector<1x32xf32> to vector<1x1x32xf32>
    %27 = vector.broadcast %26 : vector<1x1x32xf32> to vector<2x8x32xf32>
    %28 = arith.mulf %25, %27 : vector<2x8x32xf32>
    %cst_15 = arith.constant dense<0.000000e+00> : vector<2x8xf32>
    %29 = vector.multi_reduction <add>, %28, %cst_15 [2] : vector<2x8x32xf32> to vector<2x8xf32>
    %30 = vector.broadcast %9 : vector<1x1xf32> to vector<2x8xf32>
    %31 = arith.addf %29, %30 : vector<2x8xf32>
    %cst_16 = arith.constant dense<0xFF800000> : vector<2xf32>
    %32 = vector.multi_reduction <maximumf>, %31, %cst_16 [1] : vector<2x8xf32> to vector<2xf32>
    %33 = vector.shape_cast %32 : vector<2xf32> to vector<2x1xf32>
    %34 = vector.broadcast %33 : vector<2x1xf32> to vector<2x8xf32>
    %35 = arith.subf %31, %34 : vector<2x8xf32>
    %36 = math.exp %35 : vector<2x8xf32>
    %cst_17 = arith.constant dense<0.000000e+00> : vector<2xf32>
    %37 = vector.multi_reduction <add>, %36, %cst_17 [1] : vector<2x8xf32> to vector<2xf32>
    %38 = vector.shape_cast %37 : vector<2xf32> to vector<2x1xf32>
    %39 = vector.broadcast %38 : vector<2x1xf32> to vector<2x8xf32>
    %40 = arith.divf %36, %39 : vector<2x8xf32>
    %41 = vector.shape_cast %40 : vector<2x8xf32> to vector<2x8x1xf32>
    %42 = vector.broadcast %41 : vector<2x8x1xf32> to vector<2x8x64xf32>
    %43 = arith.mulf %42, %0 : vector<2x8x64xf32>
    %cst_18 = arith.constant dense<0.000000e+00> : vector<2x64xf32>
    %44 = vector.multi_reduction <add>, %43, %cst_18 [1] : vector<2x8x64xf32> to vector<2x64xf32>
    %cst_19 = arith.constant dense<0.000000e+00> : vector<2x128xf32>
    %45 = tpu.matmul %44, %11, %cst_19 {dimension_numbers = #tpu.dot_dimension_numbers<[1], [0], [0], [1], [0, 0, 1, 1], [], []>} : vector<2x64xf32>, vector<64x128xf32>, vector<2x128xf32> -> vector<2x128xf32>
    %46 = arith.addf %45, %15 : vector<2x128xf32>
    %47 = vector.broadcast %6 : vector<1x128xf32> to vector<2x128xf32>
    %48 = arith.addf %46, %47 : vector<2x128xf32>
    %49 = tpu.iota {dimensions = array<i32: 1>} : vector<2x128xi32>
    %c64_i32 = arith.constant 64 : i32
    %50 = vector.broadcast %c64_i32 : i32 to vector<2x128xi32>
    %51 = arith.cmpi sge, %49, %50 : vector<2x128xi32>
    %c96_i32 = arith.constant 96 : i32
    %52 = vector.broadcast %c96_i32 : i32 to vector<2x128xi32>
    %53 = arith.cmpi slt, %49, %52 : vector<2x128xi32>
    %54 = arith.andi %51, %53 : vector<2x128xi1>
    %cst_20 = arith.constant 2.000000e+00 : f32
    %55 = vector.broadcast %cst_20 : f32 to vector<2x128xf32>
    %56 = arith.mulf %55, %48 : vector<2x128xf32>
    %57 = arith.select %54, %56, %48 : vector<2x128xi1>, vector<2x128xf32>
    %58 = arith.negf %57 : vector<2x128xf32>
    %59 = math.exp %58 : vector<2x128xf32>
    %cst_21 = arith.constant 1.000000e+00 : f32
    %60 = vector.broadcast %cst_21 : f32 to vector<2x128xf32>
    %61 = arith.addf %60, %59 : vector<2x128xf32>
    %62 = arith.divf %60, %61 : vector<2x128xf32>
    %cst_22 = arith.constant 2.000000e+00 : f32
    %63 = vector.broadcast %cst_22 : f32 to vector<2x128xf32>
    %64 = arith.mulf %63, %62 : vector<2x128xf32>
    %cst_23 = arith.constant 1.000000e+00 : f32
    %65 = vector.broadcast %cst_23 : f32 to vector<2x128xf32>
    %66 = arith.subf %64, %65 : vector<2x128xf32>
    %67 = arith.select %54, %66, %62 : vector<2x128xi1>, vector<2x128xf32>
    %68 = vector.extract_strided_slice %67 {offsets = [0, 0], sizes = [2, 32], strides = [1, 1]} : vector<2x128xf32> to vector<2x32xf32>
    %69 = vector.extract_strided_slice %67 {offsets = [0, 32], sizes = [2, 32], strides = [1, 1]} : vector<2x128xf32> to vector<2x32xf32>
    %70 = vector.extract_strided_slice %67 {offsets = [0, 64], sizes = [2, 32], strides = [1, 1]} : vector<2x128xf32> to vector<2x32xf32>
    %71 = vector.extract_strided_slice %67 {offsets = [0, 96], sizes = [2, 32], strides = [1, 1]} : vector<2x128xf32> to vector<2x32xf32>
    %72 = arith.mulf %69, %4 : vector<2x32xf32>
    %73 = arith.mulf %68, %70 : vector<2x32xf32>
    %74 = arith.addf %72, %73 : vector<2x32xf32>
    %75 = math.tanh %74 : vector<2x32xf32>
    %76 = arith.mulf %71, %75 : vector<2x32xf32>
    %cst_24 = arith.constant 0.000000e+00 : f32
    %77 = vector.broadcast %cst_24 : f32 to vector<2x56xf32>
    %78 = tpu.concatenate %76, %74, %40, %77 in 1 : vector<2x32xf32>, vector<2x32xf32>, vector<2x8xf32>, vector<2x56xf32> -> vector<2x128xf32>
    %c0_25 = arith.constant 0 : index
    %c0_26 = arith.constant 0 : index
    %79 = vector.load %arg6[%c0_25, %c0_26] : memref<2x128xf32, #tpu.memory_space<vmem>>, vector<2x128xf32>
    tpu.vector_store %arg6[%c0_25, %c0_26], %78 {strides = array<i32>} : memref<2x128xf32, #tpu.memory_space<vmem>>, vector<2x128xf32>,
    return
  }
}

</mosaic_0001>

<llo_original>
// kernel: decoder2_pallas.1
$region0: #{decoder2_pallas.1}
  #allocation0 [shape = 'u32[]', space=smem, size = 0x4, offset = 0x4, fixed_abs, tag = 'smem constant byte address 0x4 - core index']
  #allocation1 [shape = 'u32[144,128]{1,0:T(1,128)}', space=vmem, size = 0x12000, scoped, tag = 'internal scratch']
  %s0 = inlined_call_operand.hbm [shape: f32[2,8,64], index: 0, kind: input, shape index: {}]
  %s1 = inlined_call_operand.vmem [shape: f32[1,2,32], index: 1, kind: input, shape index: {}]
  %s2 = inlined_call_operand.vmem [shape: f32[1,2,32], index: 2, kind: input, shape index: {}]
  %s3 = inlined_call_operand.hbm [shape: f32[64,160], index: 3, kind: input, shape index: {}]
  %s4 = inlined_call_operand.hbm [shape: f32[32,160], index: 4, kind: input, shape index: {}]
  %s5 = inlined_call_operand.hbm [shape: f32[4,128], index: 5, kind: input, shape index: {}]
  %s6 = inlined_call_operand.vmem [shape: f32[2,128], index: 6, kind: output, shape index: {}]
  %s7 = sld [smem:[#allocation0]]
  $region50: #{decoder2_pallas.1} parent=0
    _
  %s9 = ssub.s32 1, %s7
  %s10 = scalar_select 0, %s9, %s7
  $region1: #{decoder2_pallas.1} parent=0
    #allocation2 [shape = 'u8[8192]{0}', space=vmem, size = 0x2000, scoped, tag = 'input window, operand 0, single buffered']
    #allocation3 [shape = 's32[1]{0}', space=sflag, size = 0x4, scoped, tag = 'scoped memory for decoder2_pallas.1']
    #allocation4 [shape = 'u8[65536]{0}', space=vmem, size = 0x10000, scoped, tag = 'input window, operand 3, single buffered']
    #allocation5 [shape = 's32[1]{0}', space=sflag, size = 0x4, scoped, tag = 'scoped memory for decoder2_pallas.1']
    #allocation6 [shape = 'u8[32768]{0}', space=vmem, size = 0x8000, scoped, tag = 'input window, operand 4, single buffered']
    #allocation7 [shape = 'u8[2048]{0}', space=vmem, size = 0x800, scoped, tag = 'input window, operand 5, single buffered']
    #allocation8 [shape = 's32[1]{0}', space=sflag, size = 0x4, scoped, tag = 'scoped memory for decoder2_pallas.1']
    %11 = vsyncpa [#allocation3], 0
    %12 = vsyncpa [#allocation5], 0
    %13 = vsyncpa [#allocation8], 0
    // Predicated region
    $region2: #{decoder2_pallas.1} parent=1 // pred_check
      _
    $region3: #{decoder2_pallas.1} parent=1 // pred_check_branch
      %15 = sbr.rel (0) target = $region5
    $region4: #{decoder2_pallas.1} parent=1 // pred_region
      %s17 = ssub.s32 256, 256
      %18 = vsyncadd [#allocation3], %s17
      %s19 = sshll.u32 [#allocation2], 4
      %s20 = int_to_ptr.vmem [resolvable:$true] %s19
      %25 = dma.hbm_to_vmem [thread:$0]  %s0, 256, %s20, [#allocation3], 128, 128, 8
    $region5: #{decoder2_pallas.1} parent=1 // pred_fallthru
      _
    // Predicated region
    $region6: #{decoder2_pallas.1} parent=1 // pred_check
      _
    $region7: #{decoder2_pallas.1} parent=1 // pred_check_branch
      %27 = sbr.rel (0) target = $region9
    $region8: #{decoder2_pallas.1} parent=1 // pred_region
      _
    $region9: #{decoder2_pallas.1} parent=1 // pred_fallthru
      _
    // Predicated region
    $region10: #{decoder2_pallas.1} parent=1 // pred_check
      _
    $region11: #{decoder2_pallas.1} parent=1 // pred_check_branch
      %29 = sbr.rel (0) target = $region13
    $region12: #{decoder2_pallas.1} parent=1 // pred_region
      _
    $region13: #{decoder2_pallas.1} parent=1 // pred_fallthru
      _
    // Predicated region
    $region14: #{decoder2_pallas.1} parent=1 // pred_check
      _
    $region15: #{decoder2_pallas.1} parent=1 // pred_check_branch
      %31 = sbr.rel (0) target = $region17
    $region16: #{decoder2_pallas.1} parent=1 // pred_region
      %s33 = ssub.s32 2048, 2048
      %34 = vsyncadd [#allocation5], %s33
      %s35 = sshll.u32 [#allocation4], 4
      %s36 = int_to_ptr.vmem [resolvable:$true] %s35
      %41 = dma.hbm_to_vmem [thread:$0]  %s3, 2048, %s36, [#allocation5], 256, 256, 16
    $region17: #{decoder2_pallas.1} parent=1 // pred_fallthru
      _
    // Predicated region
    $region18: #{decoder2_pallas.1} parent=1 // pred_check
      _
    $region19: #{decoder2_pallas.1} parent=1 // pred_check_branch
      %43 = sbr.rel (0) target = $region21
    $region20: #{decoder2_pallas.1} parent=1 // pred_region
      %s45 = ssub.s32 1024, 1024
      %46 = vsyncadd [#allocation5], %s45
      %s47 = sshll.u32 [#allocation6], 4
      %s48 = int_to_ptr.vmem [resolvable:$true] %s47
      %53 = dma.hbm_to_vmem [thread:$0]  %s4, 1024, %s48, [#allocation5], 256, 256, 16
    $region21: #{decoder2_pallas.1} parent=1 // pred_fallthru
      _
    // Predicated region
    $region22: #{decoder2_pallas.1} parent=1 // pred_check
      _
    $region23: #{decoder2_pallas.1} parent=1 // pred_check_branch
      %55 = sbr.rel (0) target = $region25
    $region24: #{decoder2_pallas.1} parent=1 // pred_region
      %s57 = ssub.s32 64, 64
      %58 = vsyncadd [#allocation8], %s57
      %s60 = sshll.u32 [#allocation7], 4
      %s61 = int_to_ptr.vmem [resolvable:$true] %s60
      %63 = dma.hbm_to_vmem [thread:$0]  %s5, 64, %s61, [#allocation8]
    $region25: #{decoder2_pallas.1} parent=1 // pred_fallthru
      _
    // Predicated region
    $region26: #{decoder2_pallas.1} parent=1 // pred_check
      _
    $region27: #{decoder2_pallas.1} parent=1 // pred_check_branch
      %65 = sbr.rel (0) target = $region29
    $region28: #{decoder2_pallas.1} parent=1 // pred_region
      %66 = dma.done [#allocation3], 256
    $region29: #{decoder2_pallas.1} parent=1 // pred_fallthru
      _
    // Predicated region
    $region30: #{decoder2_pallas.1} parent=1 // pred_check
      _
    $region31: #{decoder2_pallas.1} parent=1 // pred_check_branch
      %68 = sbr.rel (0) target = $region33
    $region32: #{decoder2_pallas.1} parent=1 // pred_region
      %69 = dma.done [#allocation5], 2048
    $region33: #{decoder2_pallas.1} parent=1 // pred_fallthru
      _
    // Predicated region
    $region34: #{decoder2_pallas.1} parent=1 // pred_check
      _
    $region35: #{decoder2_pallas.1} parent=1 // pred_check_branch
      %71 = sbr.rel (0) target = $region37
    $region36: #{decoder2_pallas.1} parent=1 // pred_region
      %72 = dma.done [#allocation5], 1024
    $region37: #{decoder2_pallas.1} parent=1 // pred_fallthru
      _
    // Predicated region
    $region38: #{decoder2_pallas.1} parent=1 // pred_check
      _
    $region39: #{decoder2_pallas.1} parent=1 // pred_check_branch
      %74 = sbr.rel (0) target = $region41
    $region40: #{decoder2_pallas.1} parent=1 // pred_region
      %75 = dma.done [#allocation8], 64
    $region41: #{decoder2_pallas.1} parent=1 // pred_fallthru
      _
    %v76 = vld [vmem:[#allocation2] sm:$0xff]
    %v77 = vld [vmem:[#allocation2 + $0x8] sm:$0xff]
    %v78 = vld [vmem:[%s1] sm:$0x3]
    %v79 = vld [vmem:[%s2] sm:$0x3]
    %v80 = vld [vmem:[#allocation7] sm:$0xf]
    %v81 = vld [vmem:[#allocation4] sm:$0xff]
    %v82 = vld [vmem:[#allocation4 + $0x8] sm:$0xff]
    %v83 = vld [vmem:[#allocation4 + $0x10] sm:$0xff]
    %v84 = vld [vmem:[#allocation4 + $0x18] sm:$0xff]
    %v85 = vld [vmem:[#allocation4 + $0x20] sm:$0xff]
    %v86 = vld [vmem:[#allocation4 + $0x28] sm:$0xff]
    %v87 = vld [vmem:[#allocation4 + $0x30] sm:$0xff]
    %v88 = vld [vmem:[#allocation4 + $0x38] sm:$0xff]
    %v89 = vld [vmem:[#allocation4 + $0x40] sm:$0xff]
    %v90 = vld [vmem:[#allocation4 + $0x48] sm:$0xff]
    %v91 = vld [vmem:[#allocation4 + $0x50] sm:$0xff]
    %v92 = vld [vmem:[#allocation4 + $0x58] sm:$0xff]
    %v93 = vld [vmem:[#allocation4 + $0x60] sm:$0xff]
    %v94 = vld [vmem:[#allocation4 + $0x68] sm:$0xff]
    %v95 = vld [vmem:[#allocation4 + $0x70] sm:$0xff]
    %v96 = vld [vmem:[#allocation4 + $0x78] sm:$0xff]
    %v97 = vld [vmem:[#allocation6] sm:$0xff]
    %v98 = vld [vmem:[#allocation6 + $0x8] sm:$0xff]
    %v99 = vld [vmem:[#allocation6 + $0x10] sm:$0xff]
    %v100 = vld [vmem:[#allocation6 + $0x18] sm:$0xff]
    %v101 = vld [vmem:[#allocation6 + $0x20] sm:$0xff]
    %v102 = vld [vmem:[#allocation6 + $0x28] sm:$0xff]
    %v103 = vld [vmem:[#allocation6 + $0x30] sm:$0xff]
    %v104 = vld [vmem:[#allocation6 + $0x38] sm:$0xff]
    %vm105 = vcmask 261120
    %v107 = vsel %vm105, %v78, 0
    %109 = vmatprep.subr.mxu0 0.0
    %110 = vmatpush1.msra.mxu0 0.0
    %111 = vmatprep.subr.mxu0 0.0
    %112 = vmatpush1.msra.mxu0 0.0
    %113 = vmatprep.subr.mxu0 0.0
    %114 = vmatpush1.msra.mxu0 0.0
    %115 = vmatprep.subr.mxu0 0.0
    %116 = vmatpush1.msra.mxu0 0.0
    %117 = vmatprep.subr.mxu0 0.0
    %118 = vmatpush1.msra.mxu0 0.0
    %119 = vmatprep.subr.mxu0 0.0
    %120 = vmatpush1.msra.mxu0 0.0
    %121 = vmatprep.subr.mxu0 0.0
    %122 = vmatpush1.msra.mxu0 0.0
    %123 = vmatprep.subr.mxu0 0.0
    %124 = vmatpush1.msra.mxu0 0.0
    %125 = vmatprep.subr.mxu0 0.0
    %126 = vmatpush1.msra.mxu0 0.0
    %127 = vmatprep.subr.mxu0 0.0
    %128 = vmatpush1.msra.mxu0 0.0
    %129 = vmatprep.subr.mxu0 0.0
    %130 = vmatpush1.msra.mxu0 0.0
    %131 = vmatprep.subr.mxu0 0.0
    %132 = vmatpush1.msra.mxu0 0.0
    %133 = vmatprep.subr.mxu0 %v104
    %134 = vmatpush1.msra.mxu0 %v103
    %135 = vmatprep.subr.mxu0 %v102
    %136 = vmatpush1.msra.mxu0 %v101
    %137 = vmatprep.subr.mxu0 %v100
    %138 = vmatpush1.msra.mxu0 %v99
    %139 = vmatprep.subr.mxu0 %v98
    %140 = vmatpush1.msra.mxu0 %v97
    %141 = vmatprep.subr.mxu0 0.0
    %142 = vmatpush2.msra.mxu0 0.0
    %143 = vmatprep.subr.mxu0 0.0
    %144 = vmatpush2.msra.mxu0 0.0
    %145 = vmatprep.subr.mxu0 0.0
    %146 = vmatpush2.msra.mxu0 0.0
    %147 = vmatprep.subr.mxu0 0.0
    %148 = vmatpush2.msra.mxu0 0.0
    %149 = vmatprep.subr.mxu0 0.0
    %150 = vmatpush2.msra.mxu0 0.0
    %151 = vmatprep.subr.mxu0 0.0
    %152 = vmatpush2.msra.mxu0 0.0
    %153 = vmatprep.subr.mxu0 0.0
    %154 = vmatpush2.msra.mxu0 0.0
    %155 = vmatprep.subr.mxu0 0.0
    %156 = vmatpush2.msra.mxu0 0.0
    %157 = vmatprep.subr.mxu0 0.0
    %158 = vmatpush2.msra.mxu0 0.0
    %159 = vmatprep.subr.mxu0 0.0
    %160 = vmatpush2.msra.mxu0 0.0
    %161 = vmatprep.subr.mxu0 0.0
    %162 = vmatpush2.msra.mxu0 0.0
    %163 = vmatprep.subr.mxu0 0.0
    %164 = vmatpush2.msra.mxu0 0.0
    %165 = vmatprep.subr.mxu0 0.0
    %166 = vmatpush2.msra.mxu0 0.0
    %167 = vmatprep.subr.mxu0 0.0
    %168 = vmatpush2.msra.mxu0 0.0
    %169 = vmatprep.subr.mxu0 0.0
    %170 = vmatpush2.msra.mxu0 0.0
    %171 = vmatprep.subr.mxu0 0.0
    %172 = vmatpush2.msra.mxu0 0.0
    %173 = vmatprep.mubr.f32.mxu0 0.0
    %174 = vmatmul.mubr.f32.gmra.mxu0 %v107
    %v175 = vpop.f32.mrf.mxu0
    %v176 = vadd.f32 0.0, %v175
    %v177 = vpop.f32.mrf.mxu0
    %v178 = vadd.f32 0.0, %v177
    %179 = vdwg.mxu0
    %v180 = vlaneseq
    %v181 = vshrl.u32 %v180, 7
    %v182 = vsub.s32 1, %v181
    %v183 = vrot.slane %v80, %v182
    %v184 = vadd.f32 %v178, %v183
    %vm185 = vcmask 523264
    %v187 = vsel %vm185, %v76, 0
    %v190 = vsel %vm185, %v77, 0
    %192 = vmatprep.subr.mxu0 0.0
    %193 = vmatpush1.msra.mxu0 0.0
    %194 = vmatprep.subr.mxu0 0.0
    %195 = vmatpush1.msra.mxu0 0.0
    %196 = vmatprep.subr.mxu0 0.0
    %197 = vmatpush1.msra.mxu0 0.0
    %198 = vmatprep.subr.mxu0 0.0
    %199 = vmatpush1.msra.mxu0 0.0
    %200 = vmatprep.subr.mxu0 0.0
    %201 = vmatpush1.msra.mxu0 0.0
    %202 = vmatprep.subr.mxu0 0.0
    %203 = vmatpush1.msra.mxu0 0.0
    %204 = vmatprep.subr.mxu0 0.0
    %205 = vmatpush1.msra.mxu0 0.0
    %206 = vmatprep.subr.mxu0 0.0
    %207 = vmatpush1.msra.mxu0 0.0
    %208 = vmatprep.subr.mxu0 0.0
    %209 = vmatpush1.msra.mxu0 %v96
    %210 = vmatprep.subr.mxu0 0.0
    %211 = vmatpush1.msra.mxu0 %v94
    %212 = vmatprep.subr.mxu0 0.0
    %213 = vmatpush1.msra.mxu0 %v92
    %214 = vmatprep.subr.mxu0 0.0
    %215 = vmatpush1.msra.mxu0 %v90
    %216 = vmatprep.subr.mxu0 0.0
    %217 = vmatpush1.msra.mxu0 %v88
    %218 = vmatprep.subr.mxu0 0.0
    %219 = vmatpush1.msra.mxu0 %v86
    %220 = vmatprep.subr.mxu0 0.0
    %221 = vmatpush1.msra.mxu0 %v84
    %222 = vmatprep.subr.mxu0 0.0
    %223 = vmatpush1.msra.mxu0 %v82
    %224 = vmatprep.subr.mxu0 0.0
    %225 = vmatpush2.msra.mxu0 0.0
    %226 = vmatprep.subr.mxu0 0.0
    %227 = vmatpush2.msra.mxu0 0.0
    %228 = vmatprep.subr.mxu0 0.0
    %229 = vmatpush2.msra.mxu0 0.0
    %230 = vmatprep.subr.mxu0 0.0
    %231 = vmatpush2.msra.mxu0 0.0
    %232 = vmatprep.subr.mxu0 0.0
    %233 = vmatpush2.msra.mxu0 0.0
    %234 = vmatprep.subr.mxu0 0.0
    %235 = vmatpush2.msra.mxu0 0.0
    %236 = vmatprep.subr.mxu0 0.0
    %237 = vmatpush2.msra.mxu0 0.0
    %238 = vmatprep.subr.mxu0 0.0
    %239 = vmatpush2.msra.mxu0 0.0
    %240 = vmatprep.subr.mxu0 0.0
    %241 = vmatpush2.msra.mxu0 0.0
    %242 = vmatprep.subr.mxu0 0.0
    %243 = vmatpush2.msra.mxu0 0.0
    %244 = vmatprep.subr.mxu0 0.0
    %245 = vmatpush2.msra.mxu0 0.0
    %246 = vmatprep.subr.mxu0 0.0
    %247 = vmatpush2.msra.mxu0 0.0
    %248 = vmatprep.subr.mxu0 0.0
    %249 = vmatpush2.msra.mxu0 0.0
    %250 = vmatprep.subr.mxu0 0.0
    %251 = vmatpush2.msra.mxu0 0.0
    %252 = vmatprep.subr.mxu0 0.0
    %253 = vmatpush2.msra.mxu0 0.0
    %254 = vmatprep.subr.mxu0 0.0
    %255 = vmatpush2.msra.mxu0 0.0
    %256 = vmatprep.mubr.f32.mxu0 0.0
    %257 = vmatmul.mubr.f32.gmra.mxu0 %v187
    %v258 = vpop.f32.mrf.mxu0
    %v259 = vadd.f32 0.0, %v258
    %v260 = vpop.f32.mrf.mxu0
    %261 = vmatprep.mubr.f32.mxu0 0.0
    %262 = vmatmul.mubr.f32.gmra.mxu0 %v190
    %v263 = vpop.f32.mrf.mxu0
    %v264 = vadd.f32 0.0, %v263
    %v265 = vpop.f32.mrf.mxu0
    %266 = vdwg.mxu0
    %v269 = vunpack.c.l.s4 1966171168
    %v270 = vunpack.c.0.s8 %v269
    %v271 = vlaneseq
    %v272 = vshrl.u32 %v271, 7
    %v273 = vsub.s32 %v270, %v272
    %v274 = vrot.slane %v184, %v273
    %v275 = vcombine.high %v274, %v274
    %v277 = vunpack.c.l.s4 1966171168
    %v278 = vunpack.c.0.s8 %v277
    %v279 = vlaneseq
    %v280 = vshrl.u32 %v279, 7
    %v281 = vsub.s32 %v278, %v280
    %v282 = vrot.slane %v274, %v281
    %v284 = vunpack.c.l.s4 1966171168
    %v285 = vunpack.c.0.s8 %v284
    %v286 = vlaneseq
    %v287 = vshrl.u32 %v286, 7
    %v288 = vsub.s32 %v285, %v287
    %v289 = vrot.slane %v275, %v288
    %v290 = vlaneseq
    %v291 = vshrl.u32 %v290, 7
    %v292 = vsub.s32 0, %v291
    %v293 = vrot.slane %v282, %v292
    %v294 = vlaneseq
    %v295 = vshrl.u32 %v294, 7
    %v296 = vsub.s32 0, %v295
    %v297 = vrot.slane %v289, %v296
    %v300 = vadd.f32 %v259, %v293
    %v301 = vadd.f32 %v264, %v297
    %v302 = vtanh.pop %v300
    %v303 = vtanh.pop %v301
    %v304 = vlaneseq
    %v305 = vshrl.u32 %v304, 7
    %v306 = vsub.s32 2, %v305
    %v307 = vrot.slane %v80, %v306
    %v308 = vmul.f32 %v302, %v307
    %v309 = vmul.f32 %v303, %v307
    %v310 = vsel %vm105, %v308, 0.0
    %311 = vadd.xlane.f32.xlu0 %v310
    %v312 = vpop.xlane.xlu0 %311
    %v313 = vsel %vm105, %v309, 0.0
    %314 = vadd.xlane.f32.xlu0 %v313
    %v315 = vpop.xlane.xlu0 %314
    %v317 = vrot.slane %v80, 3
    %s318 = vtos %v317
    %v319 = vstv %s318
    %v321 = vadd.f32 %v312, %v319
    %v322 = vadd.f32 %v315, %v319
    %v325 = vlaneseq
    %v326 = vand.u32 %v325, 127
    %v327 = vlaneseq
    %v328 = vshrl.u32 %v327, 7
    %v329 = vsub.s32 %v326, %v328
    %v330 = vrot.slane %v321, %v329
    %v331 = vlaneseq
    %v332 = vshrl.u32 %v331, 7
    %v333 = vsub.s32 %v326, %v332
    %v334 = vrot.slane %v322, %v333
    %vm335 = vcmask 1041409
    %v336 = vsel %vm335, %v334, %v330
    %vm338 = vcmask 58368
    %v339 = vsel %vm338, %v336, -inf
    %340 = vmax.xlane.f32.xlu0 %v339
    %v341 = vpop.xlane.xlu0 %340
    %v343 = vlaneseq
    %v344 = vshrl.u32 %v343, 7
    %v345 = vsub.s32 0, %v344
    %v346 = vrot.slane %v341, %v345
    %v347 = vlaneseq
    %v348 = vshrl.u32 %v347, 7
    %v349 = vsub.s32 1, %v348
    %v350 = vrot.slane %v341, %v349
    %v353 = vsub.f32 %v321, %v346
    %v354 = vsub.f32 %v322, %v350
    %v355 = vmul.f32 %v353, 1.442695
    %v356 = vpow.pop %v355
    %v357 = vmul.f32 %v354, 1.442695
    %v358 = vpow.pop %v357
    %361 = vset.pattern.permute.xlu0 0
    %362 = vperm.xlu0 %361, %v356
    %v363 = vpop.permute.xlu0 %362
    %364 = vset.pattern.permute.xlu0 0
    %365 = vperm.xlu0 %364, %v358
    %v366 = vpop.permute.xlu0 %365
    %v367 = vlaneseq
    %v368 = vshrl.u32 %v367, 7
    %v369 = vsub.s32 %v326, %v368
    %v370 = vrot.slane %v363, %v369
    %v371 = vlaneseq
    %v372 = vshrl.u32 %v371, 7
    %v373 = vsub.s32 %v326, %v372
    %v374 = vrot.slane %v366, %v373
    %v375 = vsel %vm335, %v374, %v370
    %v377 = vsel %vm338, %v375, 0.0
    %378 = vadd.xlane.f32.xlu0 %v377
    %v379 = vpop.xlane.xlu0 %378
    %v381 = vlaneseq
    %v382 = vshrl.u32 %v381, 7
    %v383 = vsub.s32 0, %v382
    %v384 = vrot.slane %v379, %v383
    %v385 = vlaneseq
    %v386 = vshrl.u32 %v385, 7
    %v387 = vsub.s32 1, %v386
    %v388 = vrot.slane %v379, %v387
    %v391 = vrcp.pop %v384
    %v392 = vmul.f32 %v356, %v391
    %v393 = vrcp.pop %v388
    %v394 = vmul.f32 %v358, %v393
    %396 = vset.pattern.permute.xlu0 0
    %397 = vperm.xlu0 %396, %v392
    %v398 = vpop.permute.xlu0 %397
    %401 = vset.pattern.permute.xlu0 0
    %402 = vperm.xlu0 %401, %v394
    %v403 = vpop.permute.xlu0 %402
    %v405 = vmul.f32 %v398, %v76
    %v406 = vmul.f32 %v403, %v77
    %v407 = vsel %vm185, %v405, 0.0
    %v408 = vrot.slane %v407, 4
    %v409 = vadd.f32 %v407, %v408
    %v410 = vrot.slane %v409, 2
    %v411 = vadd.f32 %v409, %v410
    %v412 = vrot.slane %v411, 1
    %v413 = vadd.f32 %v411, %v412
    %v414 = vsel %vm185, %v406, 0.0
    %v415 = vrot.slane %v414, 4
    %v416 = vadd.f32 %v414, %v415
    %v417 = vrot.slane %v416, 2
    %v418 = vadd.f32 %v416, %v417
    %v419 = vrot.slane %v418, 1
    %v420 = vadd.f32 %v418, %v419
    %v423 = vsel %vm335, %v420, %v413
    %v424 = vsel %vm185, %v423, 0
    %426 = vmatprep.subr.mxu0 0.0
    %427 = vmatpush1.msra.mxu0 0.0
    %428 = vmatprep.subr.mxu0 0.0
    %429 = vmatpush1.msra.mxu0 0.0
    %430 = vmatprep.subr.mxu0 0.0
    %431 = vmatpush1.msra.mxu0 0.0
    %432 = vmatprep.subr.mxu0 0.0
    %433 = vmatpush1.msra.mxu0 0.0
    %434 = vmatprep.subr.mxu0 0.0
    %435 = vmatpush1.msra.mxu0 0.0
    %436 = vmatprep.subr.mxu0 0.0
    %437 = vmatpush1.msra.mxu0 0.0
    %438 = vmatprep.subr.mxu0 0.0
    %439 = vmatpush1.msra.mxu0 0.0
    %440 = vmatprep.subr.mxu0 0.0
    %441 = vmatpush1.msra.mxu0 0.0
    %442 = vmatprep.subr.mxu0 0.0
    %443 = vmatpush1.msra.mxu0 %v95
    %444 = vmatprep.subr.mxu0 0.0
    %445 = vmatpush1.msra.mxu0 %v93
    %446 = vmatprep.subr.mxu0 0.0
    %447 = vmatpush1.msra.mxu0 %v91
    %448 = vmatprep.subr.mxu0 0.0
    %449 = vmatpush1.msra.mxu0 %v89
    %450 = vmatprep.subr.mxu0 0.0
    %451 = vmatpush1.msra.mxu0 %v87
    %452 = vmatprep.subr.mxu0 0.0
    %453 = vmatpush1.msra.mxu0 %v85
    %454 = vmatprep.subr.mxu0 0.0
    %455 = vmatpush1.msra.mxu0 %v83
    %456 = vmatprep.subr.mxu0 0.0
    %457 = vmatpush1.msra.mxu0 %v81
    %458 = vmatprep.subr.mxu0 0.0
    %459 = vmatpush2.msra.mxu0 0.0
    %460 = vmatprep.subr.mxu0 0.0
    %461 = vmatpush2.msra.mxu0 0.0
    %462 = vmatprep.subr.mxu0 0.0
    %463 = vmatpush2.msra.mxu0 0.0
    %464 = vmatprep.subr.mxu0 0.0
    %465 = vmatpush2.msra.mxu0 0.0
    %466 = vmatprep.subr.mxu0 0.0
    %467 = vmatpush2.msra.mxu0 0.0
    %468 = vmatprep.subr.mxu0 0.0
    %469 = vmatpush2.msra.mxu0 0.0
    %470 = vmatprep.subr.mxu0 0.0
    %471 = vmatpush2.msra.mxu0 0.0
    %472 = vmatprep.subr.mxu0 0.0
    %473 = vmatpush2.msra.mxu0 0.0
    %474 = vmatprep.subr.mxu0 0.0
    %475 = vmatpush2.msra.mxu0 0.0
    %476 = vmatprep.subr.mxu0 0.0
    %477 = vmatpush2.msra.mxu0 0.0
    %478 = vmatprep.subr.mxu0 0.0
    %479 = vmatpush2.msra.mxu0 0.0
    %480 = vmatprep.subr.mxu0 0.0
    %481 = vmatpush2.msra.mxu0 0.0
    %482 = vmatprep.subr.mxu0 0.0
    %483 = vmatpush2.msra.mxu0 0.0
    %484 = vmatprep.subr.mxu0 0.0
    %485 = vmatpush2.msra.mxu0 0.0
    %486 = vmatprep.subr.mxu0 0.0
    %487 = vmatpush2.msra.mxu0 0.0
    %488 = vmatprep.subr.mxu0 0.0
    %489 = vmatpush2.msra.mxu0 0.0
    %490 = vmatprep.mubr.f32.mxu0 0.0
    %491 = vmatmul.mubr.f32.gmra.mxu0 %v424
    %v492 = vpop.f32.mrf.mxu0
    %v493 = vadd.f32 %v176, %v492
    %v494 = vpop.f32.mrf.mxu0
    %495 = vdwg.mxu0
    %v496 = vlaneseq
    %v497 = vshrl.u32 %v496, 7
    %v498 = vsub.s32 0, %v497
    %v499 = vrot.slane %v80, %v498
    %v500 = vadd.f32 %v493, %v499
    %vm501 = vcmp.ge.s32.totalorder %v326, 64
    %vm502 = vcmp.lt.s32.totalorder %v326, 96
    %vm503 = vmand %vm501, %vm502
    %v504 = vmul.f32 %v500, 2.0
    %v505 = vsel %vm503, %v504, %v500
    %v506 = vxor.u32 %v505, 2147483648
    %v507 = vmul.f32 %v506, 1.442695
    %v508 = vpow.pop %v507
    %v509 = vadd.f32 %v508, 1.0
    %v510 = vrcp.pop %v509
    %v511 = vmul.f32 1.0, %v510
    %v512 = vmul.f32 %v511, 2.0
    %v513 = vsub.f32 %v512, 1.0
    %v514 = vsel %vm503, %v513, %v511
    %516 = vrot.lane.b32.xlu0 %v79, 32
    %v517 = vpop.permute.xlu0 %516
    %v519 = vmul.f32 %v514, %v517
    %521 = vrot.lane.b32.xlu0 %v514, 64
    %v522 = vpop.permute.xlu0 %521
    %v524 = vmul.f32 %v514, %v522
    %526 = vrot.lane.b32.xlu0 %v524, 32
    %v527 = vpop.permute.xlu0 %526
    %v529 = vadd.f32 %v519, %v527
    %v530 = vtanh.pop %v529
    %532 = vrot.lane.b32.xlu0 %v530, 64
    %v533 = vpop.permute.xlu0 %532
    %v535 = vmul.f32 %v514, %v533
    %537 = vrot.lane.b32.xlu0 %v535, 32
    %v538 = vpop.permute.xlu0 %537
    %v540 = vadd.s32 %v326, 4294967232
    %v541 = vlaneseq
    %v542 = vshrl.u32 %v541, 7
    %v543 = vsub.s32 %v540, %v542
    %v544 = vrot.slane %v398, %v543
    %v545 = vlaneseq
    %v546 = vshrl.u32 %v545, 7
    %v547 = vsub.s32 %v540, %v546
    %v548 = vrot.slane %v403, %v547
    %v549 = vsel %vm335, %v548, %v544
    %v551 = vsel %vm105, %v538, %v529
    %v552 = vsel %vm185, %v551, %v549
    %vm553 = vcmask 588800
    %v554 = vsel %vm553, %v552, 0.0
    %555 = vst [vmem:[%s6] sm:$0x3] %v554
    // Predicated region
    $region42: #{decoder2_pallas.1} parent=1 // pred_check
      _
    $region43: #{decoder2_pallas.1} parent=1 // pred_check_branch
      %557 = sbr.rel (0) target = $region45
    $region44: #{decoder2_pallas.1} parent=1 // pred_region
      _
    $region45: #{decoder2_pallas.1} parent=1 // pred_fallthru
      _
    // Predicated region
    $region46: #{decoder2_pallas.1} parent=1 // pred_check
      _
    $region47: #{decoder2_pallas.1} parent=1 // pred_check_branch
      %559 = sbr.rel (0) target = $region49
    $region48: #{decoder2_pallas.1} parent=1 // pred_region
      _
    $region49: #{decoder2_pallas.1} parent=1 // pred_fallthru
      _
    %560 = vsyncpa [#allocation3], 1
    %561 = vsyncpa [#allocation5], 1
    %562 = vsyncpa [#allocation8], 1

</llo_original>
